<compile_context>
chip_gen: v7x
topology: tpu7x:2x2x1
jax: 0.10.0
libtpu: 0.0.40
codegen_flags: <defaults>
</compile_context>

<pallas_src>
import jax
import jax.numpy as jnp
from jax.experimental import pallas as pl
from jax.experimental.pallas import tpu as pltpu


# ---------------------------------------------------------------------------
# Pallas kernel: per-row (i.e. per (sample, channel)) fused scale+shift
# ---------------------------------------------------------------------------
def _normalize_kernel(x_ref, scale_ref, shift_ref, o_ref):
    # x_ref:     (tile_rows, tile_hw)
    # scale_ref: (tile_rows, 1)   1/std[c]    , broadcasts over the lane axis
    # shift_ref: (tile_rows, 1)   -mean[c]/std[c]
    o_ref[...] = x_ref[...] * scale_ref[...] + shift_ref[...]


def _pick_tile(full: int, unit: int, target: int) -> int:
    """Largest multiple of `unit` that divides `full` and is <= `target`.

    Falls back to the full extent (always a legal block dim) if `full` is not
    a multiple of `unit` or no suitable divisor exists.
    """
    if full % unit != 0:
        return full
    best = None
    d = unit
    while d <= full:
        if full % d == 0 and d <= target:
            best = d
        d += unit
    return best if best is not None else full


@jax.jit
def auto_normalize_forward(x, scale_rows, shift_rows):
    """Apply x * scale[c] + shift[c]  (== (x - mean[c]) / std[c]) to NCHW x.

    x:          (N, C, H, W) float32
    scale_rows: (N*C, 1) float32  -- 1/std per (sample, channel) row
    shift_rows: (N*C, 1) float32  -- -mean/std per (sample, channel) row
    """
    N, C, H, W = x.shape
    NC, HW = N * C, H * W

    x2 = x.reshape(NC, HW)  # contiguous reshape, no data movement

    # Tile sizes: lane-dense, (8,128)-aligned (or full extent), <= ~4 MiB/block
    # so double-buffered in+out stays well inside VMEM on all generations.
    tile_rows = _pick_tile(NC, 8, 256)
    tile_hw = _pick_tile(HW, 128, 4096)
    grid = (NC // tile_rows, HW // tile_hw)

    out2 = pl.pallas_call(
        _normalize_kernel,
        out_shape=jax.ShapeDtypeStruct((NC, HW), x.dtype),
        grid=grid,
        in_specs=[
            pl.BlockSpec((tile_rows, tile_hw), lambda i, j: (i, j)),
            pl.BlockSpec((tile_rows, 1), lambda i, j: (i, 0)),
            pl.BlockSpec((tile_rows, 1), lambda i, j: (i, 0)),
        ],
        out_specs=pl.BlockSpec((tile_rows, tile_hw), lambda i, j: (i, j)),
        input_output_aliases={0: 0},  # write result back into x2's buffer
        compiler_params=pltpu.CompilerParams(
            dimension_semantics=("parallel", "parallel"),
            vmem_limit_bytes=64 * 1024 * 1024,
        ),
    )(x2, scale_rows, shift_rows)

    return out2.reshape(N, C, H, W)


# ---------------------------------------------------------------------------
# Parameter build (done once, outside the forward hot path)
# ---------------------------------------------------------------------------
def prepare_norm_params(mean, std, n_samples, dtype=jnp.float32, eps=1e-12):
    """Fold per-channel mean/std into per-row scale/shift columns.

    Returns (scale_rows, shift_rows), each of shape (n_samples * C, 1):
      scale = 1/std,  shift = -mean/std   (row i corresponds to channel i % C).
    """
    inv_std = 1.0 / jnp.maximum(std, eps)  # eps guard against near-zero std
    scale = jnp.tile(inv_std, (n_samples,)).reshape(-1, 1).astype(dtype)
    shift = jnp.tile(-mean * inv_std, (n_samples,)).reshape(-1, 1).astype(dtype)
    return scale, shift


# ---------------------------------------------------------------------------
# Deterministic "dataset scan" to produce per-channel mean / std parameters.
# Mirrors the PyTorch __init__ accumulation (torch.std is unbiased, ddof=1).
# ---------------------------------------------------------------------------
def compute_dataset_stats(key, num_batches=3, batch_size=4, channels=4, hw=(16, 16)):
    H, W = hw
    mean_acc = jnp.zeros((channels,), jnp.float32)
    std_acc = jnp.zeros((channels,), jnp.float32)
    nb_samples = 0.0
    for _ in range(num_batches):
        key, sub = jax.random.split(key)
        # Synthetic "images" in [0, 1] like ToTensor() output.
        data = jax.random.uniform(sub, (batch_size, channels, H, W), jnp.float32)
        flat = data.reshape(batch_size, channels, -1)
        mean_acc = mean_acc + flat.mean(axis=2).sum(axis=0)
        std_acc = std_acc + flat.std(axis=2, ddof=1).sum(axis=0)
        nb_samples += batch_size
    return mean_acc / nb_samples, std_acc / nb_samples


if __name__ == "__main__":
    key = jax.random.PRNGKey(0)
    k_stats, k_x = jax.random.split(key)

    N, C, H, W = 2, 4, 16, 16

    # Parameters (per-channel mean / std), deterministic, computed once.
    mean, std = compute_dataset_stats(k_stats, channels=C, hw=(H, W))
    scale_rows, shift_rows = prepare_norm_params(mean, std, n_samples=N)

    # Example forward input.
    x = jax.random.uniform(k_x, (N, C, H, W), jnp.float32)

    out = auto_normalize_forward(x, scale_rows, shift_rows)
    out = jax.block_until_ready(out)

    # Reference check against the original (x - mean) / std semantics.
    ref = (x - mean[None, :, None, None]) / std[None, :, None, None]
    assert out.shape == (N, C, H, W)
    assert jnp.allclose(out, ref, atol=1e-5, rtol=1e-5)

    print("KERNEL_OK")
</pallas_src>

<mosaic_0001>
module attributes {stable_mosaic.version = 11 : i64} {
  func.func @_normalize_kernel(%arg0: i32, %arg1: i32, %arg2: memref<8x256xf32, #tpu.memory_space<vmem>>, %arg3: memref<8x1xf32, #tpu.memory_space<vmem>>, %arg4: memref<8x1xf32, #tpu.memory_space<vmem>>, %arg5: memref<8x256xf32, #tpu.memory_space<vmem>>) attributes {dimension_semantics = [#tpu.dimension_semantics<parallel>, #tpu.dimension_semantics<parallel>], iteration_bounds = array<i64: 1, 1>, scalar_prefetch = 0 : i64, scratch_operands = 0 : i64, tpu.core_type = #tpu.core_type<tc>, window_params = [{transform_indices = @transform_0, window_bounds = array<i64: 8, 256>}, {transform_indices = @transform_1, window_bounds = array<i64: 8, 1>}, {transform_indices = @transform_2, window_bounds = array<i64: 8, 1>}, {transform_indices = @transform_3, window_bounds = array<i64: 8, 256>}]} {
    %c0 = arith.constant 0 : index
    %c0_0 = arith.constant 0 : index
    %0 = vector.load %arg2[%c0, %c0_0] : memref<8x256xf32, #tpu.memory_space<vmem>>, vector<8x256xf32>
    %c0_1 = arith.constant 0 : index
    %c0_2 = arith.constant 0 : index
    %1 = vector.load %arg3[%c0_1, %c0_2] : memref<8x1xf32, #tpu.memory_space<vmem>>, vector<8x1xf32>
    %2 = vector.broadcast %1 : vector<8x1xf32> to vector<8x256xf32>
    %3 = arith.mulf %0, %2 : vector<8x256xf32>
    %c0_3 = arith.constant 0 : index
    %c0_4 = arith.constant 0 : index
    %4 = vector.load %arg4[%c0_3, %c0_4] : memref<8x1xf32, #tpu.memory_space<vmem>>, vector<8x1xf32>
    %5 = vector.broadcast %4 : vector<8x1xf32> to vector<8x256xf32>
    %6 = arith.addf %3, %5 : vector<8x256xf32>
    %c0_5 = arith.constant 0 : index
    %c0_6 = arith.constant 0 : index
    %7 = vector.load %arg5[%c0_5, %c0_6] : memref<8x256xf32, #tpu.memory_space<vmem>>, vector<8x256xf32>
    tpu.vector_store %arg5[%c0_5, %c0_6], %6 {strides = array<i32>} : memref<8x256xf32, #tpu.memory_space<vmem>>, vector<8x256xf32>,
    return
  }
  func.func @transform_0(%arg0: i32, %arg1: i32) -> (i32, i32) {
    %c0_i32 = arith.constant 0 : i32
    return %arg0, %arg1 : i32, i32
  }
  func.func @transform_1(%arg0: i32, %arg1: i32) -> (i32, i32) {
    %c0_i32 = arith.constant 0 : i32
    %c0_i32_0 = arith.constant 0 : i32
    return %arg0, %c0_i32 : i32, i32
  }
  func.func @transform_2(%arg0: i32, %arg1: i32) -> (i32, i32) {
    %c0_i32 = arith.constant 0 : i32
    %c0_i32_0 = arith.constant 0 : i32
    return %arg0, %c0_i32 : i32, i32
  }
  func.func @transform_3(%arg0: i32, %arg1: i32) -> (i32, i32) {
    %c0_i32 = arith.constant 0 : i32
    return %arg0, %arg1 : i32, i32
  }
}

</mosaic_0001>

<llo_original>
// kernel: auto_normalize_forward.1
$region0: #{auto_normalize_forward.1}
  #allocation0 [shape = 'u32[]', space=smem, size = 0x4, offset = 0x4, fixed_abs, tag = 'smem constant byte address 0x4 - core index']
  #allocation1 [shape = 'u32[144,128]{1,0:T(1,128)}', space=vmem, size = 0x12000, scoped, tag = 'internal scratch']
  %s0 = inlined_call_operand.hbm [shape: f32[8,256], index: 0, kind: input, shape index: {}, may-alias: {0,3}]
  %s1 = inlined_call_operand.hbm [shape: f32[8,1], index: 1, kind: input, shape index: {}]
  %s2 = inlined_call_operand.hbm [shape: f32[8,1], index: 2, kind: input, shape index: {}]
  %s3 = inlined_call_operand.hbm [shape: f32[8,256], index: 3, kind: output, shape index: {}, may-alias: {0,3}]
  %s4 = sld [smem:[#allocation0]]
  $region34: #{auto_normalize_forward.1} parent=0
    _
  %s6 = ssub.s32 1, %s4
  %s7 = scalar_select 0, %s6, %s4
  $region1: #{auto_normalize_forward.1} parent=0
    #allocation2 [shape = 'u8[8192]{0}', space=vmem, size = 0x2000, scoped, tag = 'input window, operand 0, single buffered']
    #allocation3 [shape = 's32[1]{0}', space=sflag, size = 0x4, scoped, tag = 'scoped memory for auto_normalize_forward.1']
    #allocation4 [shape = 's32[1]{0}', space=sflag, size = 0x4, scoped, tag = 'scoped memory for auto_normalize_forward.1']
    #allocation5 [shape = 'u8[4096]{0}', space=vmem, size = 0x1000, scoped, tag = 'input window, operand 1, single buffered']
    #allocation6 [shape = 's32[1]{0}', space=sflag, size = 0x4, scoped, tag = 'scoped memory for auto_normalize_forward.1']
    #allocation7 [shape = 'u8[4096]{0}', space=vmem, size = 0x1000, scoped, tag = 'input window, operand 2, single buffered']
    #allocation8 [shape = 'u8[8192]{0}', space=vmem, size = 0x2000, scoped, tag = 'output window, operand 0, single buffered']
    %8 = vsyncpa [#allocation3], 0
    %9 = vsyncpa [#allocation6], 0
    %10 = vsyncpa [#allocation4], 0
    // Predicated region
    $region2: #{auto_normalize_forward.1} parent=1 // pred_check
      _
    $region3: #{auto_normalize_forward.1} parent=1 // pred_check_branch
      %12 = sbr.rel (0) target = $region5
    $region4: #{auto_normalize_forward.1} parent=1 // pred_region
      %s14 = ssub.s32 256, 256
      %15 = vsyncadd [#allocation3], %s14
      %s17 = sshll.u32 [#allocation2], 4
      %s18 = int_to_ptr.vmem [resolvable:$true] %s17
      %20 = dma.hbm_to_vmem [thread:$0]  %s0, 256, %s18, [#allocation3]
    $region5: #{auto_normalize_forward.1} parent=1 // pred_fallthru
      _
    // Predicated region
    $region6: #{auto_normalize_forward.1} parent=1 // pred_check
      _
    $region7: #{auto_normalize_forward.1} parent=1 // pred_check_branch
      %22 = sbr.rel (0) target = $region9
    $region8: #{auto_normalize_forward.1} parent=1 // pred_region
      %s24 = ssub.s32 128, 128
      %25 = vsyncadd [#allocation6], %s24
      %s27 = sshll.u32 [#allocation5], 4
      %s28 = int_to_ptr.vmem [resolvable:$true] %s27
      %30 = dma.hbm_to_vmem [thread:$0]  %s1, 128, %s28, [#allocation6]
    $region9: #{auto_normalize_forward.1} parent=1 // pred_fallthru
      _
    // Predicated region
    $region10: #{auto_normalize_forward.1} parent=1 // pred_check
      _
    $region11: #{auto_normalize_forward.1} parent=1 // pred_check_branch
      %32 = sbr.rel (0) target = $region13
    $region12: #{auto_normalize_forward.1} parent=1 // pred_region
      %s34 = ssub.s32 128, 128
      %35 = vsyncadd [#allocation6], %s34
      %s37 = sshll.u32 [#allocation7], 4
      %s38 = int_to_ptr.vmem [resolvable:$true] %s37
      %40 = dma.hbm_to_vmem [thread:$0]  %s2, 128, %s38, [#allocation6]
    $region13: #{auto_normalize_forward.1} parent=1 // pred_fallthru
      _
    // Predicated region
    $region14: #{auto_normalize_forward.1} parent=1 // pred_check
      _
    $region15: #{auto_normalize_forward.1} parent=1 // pred_check_branch
      %42 = sbr.rel (0) target = $region17
    $region16: #{auto_normalize_forward.1} parent=1 // pred_region
      %43 = dma.done [#allocation3], 256
    $region17: #{auto_normalize_forward.1} parent=1 // pred_fallthru
      _
    // Predicated region
    $region18: #{auto_normalize_forward.1} parent=1 // pred_check
      _
    $region19: #{auto_normalize_forward.1} parent=1 // pred_check_branch
      %45 = sbr.rel (0) target = $region21
    $region20: #{auto_normalize_forward.1} parent=1 // pred_region
      %46 = dma.done [#allocation6], 128
    $region21: #{auto_normalize_forward.1} parent=1 // pred_fallthru
      _
    // Predicated region
    $region22: #{auto_normalize_forward.1} parent=1 // pred_check
      _
    $region23: #{auto_normalize_forward.1} parent=1 // pred_check_branch
      %48 = sbr.rel (0) target = $region25
    $region24: #{auto_normalize_forward.1} parent=1 // pred_region
      %49 = dma.done [#allocation6], 128
    $region25: #{auto_normalize_forward.1} parent=1 // pred_fallthru
      _
    %v50 = vld [vmem:[#allocation2] sm:$0xff]
    %v51 = vld [vmem:[#allocation2 + $0x8] sm:$0xff]
    %v52 = vld [vmem:[#allocation5] sm:$0xff]
    %54 = vset.pattern.permute.xlu0 0
    %55 = vperm.xlu0 %54, %v52
    %v56 = vpop.permute.xlu0 %55
    %v58 = vmul.f32 %v50, %v56
    %v59 = vmul.f32 %v51, %v56
    %v60 = vld [vmem:[#allocation7] sm:$0xff]
    %62 = vset.pattern.permute.xlu0 0
    %63 = vperm.xlu0 %62, %v60
    %v64 = vpop.permute.xlu0 %63
    %v66 = vadd.f32 %v58, %v64
    %v67 = vadd.f32 %v59, %v64
    %68 = vst [vmem:[#allocation8] sm:$0xff] %v66
    %69 = vst [vmem:[#allocation8 + $0x8] sm:$0xff] %v67
    // Predicated region
    $region26: #{auto_normalize_forward.1} parent=1 // pred_check
      _
    $region27: #{auto_normalize_forward.1} parent=1 // pred_check_branch
      %71 = sbr.rel (0) target = $region29
    $region28: #{auto_normalize_forward.1} parent=1 // pred_region
      %s73 = ssub.s32 256, 256
      %74 = vsyncadd [#allocation4], %s73
      %s76 = sshll.u32 [#allocation8], 4
      %s77 = int_to_ptr.vmem [resolvable:$true] %s76
      %79 = dma.vmem_to_hbm [thread:$0]  %s77, 256, %s3, [#allocation4]
    $region29: #{auto_normalize_forward.1} parent=1 // pred_fallthru
      _
    // Predicated region
    $region30: #{auto_normalize_forward.1} parent=1 // pred_check
      _
    $region31: #{auto_normalize_forward.1} parent=1 // pred_check_branch
      %81 = sbr.rel (0) target = $region33
    $region32: #{auto_normalize_forward.1} parent=1 // pred_region
      %82 = dma.done [#allocation4], 256
    $region33: #{auto_normalize_forward.1} parent=1 // pred_fallthru
      _
    %83 = vsyncpa [#allocation3], 1
    %84 = vsyncpa [#allocation6], 1
    %85 = vsyncpa [#allocation4], 1

</llo_original>
